<compile_context>
chip_gen: v7x
topology: tpu7x:2x2x1
jax: 0.10.0
libtpu: 0.0.40
codegen_flags: <defaults>
</compile_context>

<pallas_src>
import jax
import jax.numpy as jnp
from jax.experimental import pallas as pl
from jax.experimental.pallas import tpu as pltpu


def dice_ce_kernel(logits_ref, labels_ref,
                   inter_out, psum_out, ohsum_out, nll_out,
                   inter_sc, psum_sc, ohsum_sc, nll_sc):
    h = pl.program_id(2)

    # Zero the accumulators on the first spatial tile of this (n, partition).
    @pl.when(h == 0)
    def _():
        inter_sc[...] = jnp.zeros_like(inter_sc)
        psum_sc[...] = jnp.zeros_like(psum_sc)
        ohsum_sc[...] = jnp.zeros_like(ohsum_sc)
        nll_sc[...] = jnp.zeros_like(nll_sc)

    x = logits_ref[0].astype(jnp.float32)            # (C, T) f32, cast in-kernel
    C, T = x.shape
    labels = labels_ref[0]                           # (1, T) int32

    # softmax over the class axis: one reciprocal per pixel, then C*T muls.
    m = jnp.max(x, axis=0, keepdims=True)
    e = jnp.exp(x - m)
    inv = 1.0 / jnp.sum(e, axis=0, keepdims=True)    # (1, T)
    p = e * inv                                      # (C, T) probabilities

    cls = jax.lax.broadcasted_iota(jnp.int32, (C, T), 0)
    oh = (cls == labels).astype(jnp.float32)         # (C, T) one-hot

    # log-softmax of the already-softmaxed probs (double softmax, matching the
    # PyTorch module).  p in [0, 1] => exp(p) <= e, so no max shift is needed.
    lse = jnp.log(jnp.sum(jnp.exp(p), axis=0, keepdims=True))   # (1, T)

    # Full-lane-width VPU accumulation; cross-lane reductions and the narrow
    # (C, 1) stores are deferred to the last spatial tile.
    inter_sc[...] += p * oh
    psum_sc[...] += p
    ohsum_sc[...] += oh
    nll_sc[...] += oh * (lse - p)                    # oh * (-log_softmax(p))

    @pl.when(h == pl.num_programs(2) - 1)
    def _():
        inter_out[0, 0] = jnp.sum(inter_sc[...], axis=1, keepdims=True)
        psum_out[0, 0] = jnp.sum(psum_sc[...], axis=1, keepdims=True)
        ohsum_out[0, 0] = jnp.sum(ohsum_sc[...], axis=1, keepdims=True)
        nll_out[0, 0] = jnp.sum(nll_sc[...], axis=1, keepdims=True)


def _pick_hw_tile(hw, max_lanes=8192):
    """Largest lane-aligned tile that divides HW (full HW when it fits)."""
    if hw <= max_lanes:
        return hw
    t = (max_lanes // 128) * 128
    while t >= 128:
        if hw % t == 0:
            return t
        t -= 128
    return hw  # no aligned divisor: fall back to a single full-width tile


def dice_ce_loss(y_pred, y_true, weight, eps=1e-7, hw_tile=None,
                 spatial_parts=None):
    """y_pred: (N, C, H, W) logits (any float dtype); y_true: (N, H, W) ints."""
    N, C, H, W = y_pred.shape
    HW = H * W

    # No wrapper-side upcast: stream logits in their native dtype.
    logits = y_pred.reshape(N, C, HW)
    labels = y_true.reshape(N, 1, HW).astype(jnp.int32)
    w = jnp.asarray(weight, dtype=jnp.float32).reshape(C)

    if hw_tile is None:
        hw_tile = _pick_hw_tile(HW)
    assert HW % hw_tile == 0, "spatial size must be a multiple of the tile"
    n_tiles = HW // hw_tile

    if spatial_parts is None:
        # Small batches can't fill two TensorCores (v7x megacore) on the batch
        # axis alone; split the spatial loop into two parallel partitions.
        spatial_parts = 2 if (N < 4 and n_tiles >= 2 and n_tiles % 2 == 0) else 1
    P = spatial_parts
    assert n_tiles % P == 0, "spatial partitions must divide the tile count"
    n_inner = n_tiles // P

    # Explicit VMEM budget (double-buffered inputs + accumulator scratch),
    # capped at 64 MiB so a tile that fits v5e/v6e cannot silently OOM on v7x.
    cpad = ((C + 7) // 8) * 8
    itemsize = jnp.dtype(logits.dtype).itemsize
    est_bytes = (2 * cpad * hw_tile * itemsize      # logits double-buffer
                 + 2 * 8 * hw_tile * 4              # labels double-buffer
                 + 4 * cpad * hw_tile * 4           # accumulator scratch
                 + (1 << 20))                       # outputs + slack
    vmem_limit = int(min(64 * 1024 * 1024, max(32 * 1024 * 1024, 2 * est_bytes)))

    grid = (N, P, n_inner)
    out_shape = (
        jax.ShapeDtypeStruct((N, P, C, 1), jnp.float32),   # sum p * onehot
        jax.ShapeDtypeStruct((N, P, C, 1), jnp.float32),   # sum p
        jax.ShapeDtypeStruct((N, P, C, 1), jnp.float32),   # sum onehot
        jax.ShapeDtypeStruct((N, P, C, 1), jnp.float32),   # sum -log_softmax(p)[label]
    )
    spatial_map = lambda n, po, h: (n, 0, po * n_inner + h)
    out_spec = pl.BlockSpec((1, 1, C, 1), lambda n, po, h: (n, po, 0, 0))

    grid_spec = pltpu.PrefetchScalarGridSpec(
        num_scalar_prefetch=0,
        grid=grid,
        in_specs=[
            pl.BlockSpec((1, C, hw_tile), spatial_map),
            pl.BlockSpec((1, 1, hw_tile), spatial_map),
        ],
        out_specs=[out_spec, out_spec, out_spec, out_spec],
        scratch_shapes=[pltpu.VMEM((C, hw_tile), jnp.float32)] * 4,
    )

    inter_p, psum_p, ohsum_p, nll_p = pl.pallas_call(
        dice_ce_kernel,
        out_shape=out_shape,
        grid_spec=grid_spec,
        compiler_params=pltpu.CompilerParams(
            dimension_semantics=("parallel", "parallel", "arbitrary"),
            vmem_limit_bytes=vmem_limit),
    )(logits, labels)

    # Tiny scalar glue (partition sum, eps, class weighting, means) in JAX.
    inter = jnp.sum(inter_p, axis=1)[..., 0]        # (N, C)
    psum = jnp.sum(psum_p, axis=1)[..., 0]          # (N, C)
    ohsum = jnp.sum(ohsum_p, axis=1)[..., 0]        # (N, C)
    nll = jnp.sum(nll_p, axis=1)[..., 0]            # (N, C)

    union = psum + ohsum
    dice_coeff = (2.0 * inter + eps) / (union + eps)
    dice_loss = 1.0 - jnp.mean(dice_coeff)

    ce_num = jnp.sum(nll * w[None, :])              # sum_pixels w[label] * NLL
    ce_den = jnp.sum(ohsum * w[None, :])            # sum_pixels w[label]
    ce = ce_num / ce_den
    return ce + dice_loss


def dice_ce_ref(y_pred, y_true, weight, eps=1e-7):
    """Pure-JAX reference replicating the PyTorch module semantics."""
    C = y_pred.shape[1]
    p = jax.nn.softmax(y_pred.astype(jnp.float32), axis=1)
    oh = jax.nn.one_hot(y_true, C, axis=1, dtype=jnp.float32)    # (N, C, H, W)
    inter = jnp.sum(p * oh, axis=(2, 3))
    union = jnp.sum(p, axis=(2, 3)) + jnp.sum(oh, axis=(2, 3))
    dice_coeff = (2.0 * inter + eps) / (union + eps)
    dice_loss = 1.0 - jnp.mean(dice_coeff)
    lsm = jax.nn.log_softmax(p, axis=1)             # double softmax, like torch
    nll = -jnp.sum(oh * lsm, axis=1)                # (N, H, W)
    wpix = jnp.asarray(weight, jnp.float32)[y_true]  # (N, H, W)
    ce = jnp.sum(wpix * nll) / jnp.sum(wpix)
    return ce + dice_loss


if __name__ == "__main__":
    N, C, H, W = 2, 3, 16, 16
    key = jax.random.PRNGKey(0)
    k1, k2 = jax.random.split(key)
    y_pred = jax.random.normal(k1, (N, C, H, W), dtype=jnp.float32)
    y_true = jax.random.randint(k2, (N, H, W), 0, C, dtype=jnp.int32)
    weight = jnp.array([1.0, 1.0, 1.0], dtype=jnp.float32)   # module default

    ref = dice_ce_ref(y_pred, y_true, weight)

    # Default path: single full-width spatial tile.
    out = jax.block_until_ready(dice_ce_loss(y_pred, y_true, weight))
    assert jnp.allclose(out, ref, atol=1e-4, rtol=1e-4), (out, ref)

    # Multi-tile accumulation path (h axis > 1).
    out2 = jax.block_until_ready(
        dice_ce_loss(y_pred, y_true, weight, hw_tile=128, spatial_parts=1))
    assert jnp.allclose(out2, ref, atol=1e-4, rtol=1e-4), (out2, ref)

    # Spatial-partition (megacore-friendly) path.
    out3 = jax.block_until_ready(
        dice_ce_loss(y_pred, y_true, weight, hw_tile=128, spatial_parts=2))
    assert jnp.allclose(out3, ref, atol=1e-4, rtol=1e-4), (out3, ref)

    print("KERNEL_OK")
</pallas_src>

<mosaic_0001>
module attributes {stable_mosaic.version = 11 : i64} {
  func.func @dice_ce_kernel(%arg0: i32, %arg1: i32, %arg2: i32, %arg3: memref<1x3x256xf32, #tpu.memory_space<vmem>>, %arg4: memref<1x1x256xi32, #tpu.memory_space<vmem>>, %arg5: memref<1x1x3x1xf32, #tpu.memory_space<vmem>>, %arg6: memref<1x1x3x1xf32, #tpu.memory_space<vmem>>, %arg7: memref<1x1x3x1xf32, #tpu.memory_space<vmem>>, %arg8: memref<1x1x3x1xf32, #tpu.memory_space<vmem>>, %arg9: memref<3x256xf32, #tpu.memory_space<vmem>>, %arg10: memref<3x256xf32, #tpu.memory_space<vmem>>, %arg11: memref<3x256xf32, #tpu.memory_space<vmem>>, %arg12: memref<3x256xf32, #tpu.memory_space<vmem>>) attributes {dimension_semantics = [#tpu.dimension_semantics<parallel>, #tpu.dimension_semantics<parallel>, #tpu.dimension_semantics<arbitrary>], iteration_bounds = array<i64: 2, 1, 1>, scalar_prefetch = 0 : i64, scratch_operands = 4 : i64, tpu.core_type = #tpu.core_type<tc>, window_params = [{transform_indices = @transform_0, window_bounds = array<i64: 1, 3, 256>}, {transform_indices = @transform_1, window_bounds = array<i64: 1, 1, 256>}, {transform_indices = @transform_2, window_bounds = array<i64: 1, 1, 3, 1>}, {transform_indices = @transform_3, window_bounds = array<i64: 1, 1, 3, 1>}, {transform_indices = @transform_4, window_bounds = array<i64: 1, 1, 3, 1>}, {transform_indices = @transform_5, window_bounds = array<i64: 1, 1, 3, 1>}]} {
    %c0_i32 = arith.constant 0 : i32
    %0 = arith.cmpi eq, %arg2, %c0_i32 : i32
    %1 = arith.extui %0 : i1 to i32
    %c0_i32_0 = arith.constant 0 : i32
    %2 = arith.cmpi ne, %1, %c0_i32_0 : i32
    scf.if %2 {
      %cst_27 = arith.constant 0.000000e+00 : f32
      %46 = vector.broadcast %cst_27 : f32 to vector<3x256xf32>
      %c0_28 = arith.constant 0 : index
      %c0_29 = arith.constant 0 : index
      %47 = vector.load %arg9[%c0_28, %c0_29] : memref<3x256xf32, #tpu.memory_space<vmem>>, vector<3x256xf32>
      tpu.vector_store %arg9[%c0_28, %c0_29], %46 {strides = array<i32>} : memref<3x256xf32, #tpu.memory_space<vmem>>, vector<3x256xf32>,
      %cst_30 = arith.constant 0.000000e+00 : f32
      %48 = vector.broadcast %cst_30 : f32 to vector<3x256xf32>
      %c0_31 = arith.constant 0 : index
      %c0_32 = arith.constant 0 : index
      %49 = vector.load %arg10[%c0_31, %c0_32] : memref<3x256xf32, #tpu.memory_space<vmem>>, vector<3x256xf32>
      tpu.vector_store %arg10[%c0_31, %c0_32], %48 {strides = array<i32>} : memref<3x256xf32, #tpu.memory_space<vmem>>, vector<3x256xf32>,
      %cst_33 = arith.constant 0.000000e+00 : f32
      %50 = vector.broadcast %cst_33 : f32 to vector<3x256xf32>
      %c0_34 = arith.constant 0 : index
      %c0_35 = arith.constant 0 : index
      %51 = vector.load %arg11[%c0_34, %c0_35] : memref<3x256xf32, #tpu.memory_space<vmem>>, vector<3x256xf32>
      tpu.vector_store %arg11[%c0_34, %c0_35], %50 {strides = array<i32>} : memref<3x256xf32, #tpu.memory_space<vmem>>, vector<3x256xf32>,
      %cst_36 = arith.constant 0.000000e+00 : f32
      %52 = vector.broadcast %cst_36 : f32 to vector<3x256xf32>
      %c0_37 = arith.constant 0 : index
      %c0_38 = arith.constant 0 : index
      %53 = vector.load %arg12[%c0_37, %c0_38] : memref<3x256xf32, #tpu.memory_space<vmem>>, vector<3x256xf32>
      tpu.vector_store %arg12[%c0_37, %c0_38], %52 {strides = array<i32>} : memref<3x256xf32, #tpu.memory_space<vmem>>, vector<3x256xf32>,
    } else {
    }
    %c0 = arith.constant 0 : index
    %c0_1 = arith.constant 0 : index
    %c0_2 = arith.constant 0 : index
    %3 = vector.load %arg3[%c0, %c0_1, %c0_2] : memref<1x3x256xf32, #tpu.memory_space<vmem>>, vector<1x3x256xf32>
    %4 = vector.shape_cast %3 : vector<1x3x256xf32> to vector<3x256xf32>
    %c0_3 = arith.constant 0 : index
    %c0_4 = arith.constant 0 : index
    %c0_5 = arith.constant 0 : index
    %5 = vector.load %arg4[%c0_3, %c0_4, %c0_5] : memref<1x1x256xi32, #tpu.memory_space<vmem>>, vector<1x1x256xi32>
    %6 = vector.shape_cast %5 : vector<1x1x256xi32> to vector<1x256xi32>
    %cst = arith.constant dense<0xFF800000> : vector<256xf32>
    %7 = vector.multi_reduction <maximumf>, %4, %cst [0] : vector<3x256xf32> to vector<256xf32>
    %8 = vector.shape_cast %7 : vector<256xf32> to vector<1x256xf32>
    %9 = vector.broadcast %8 : vector<1x256xf32> to vector<3x256xf32>
    %10 = arith.subf %4, %9 : vector<3x256xf32>
    %11 = math.exp %10 : vector<3x256xf32>
    %cst_6 = arith.constant dense<0.000000e+00> : vector<256xf32>
    %12 = vector.multi_reduction <add>, %11, %cst_6 [0] : vector<3x256xf32> to vector<256xf32>
    %13 = vector.shape_cast %12 : vector<256xf32> to vector<1x256xf32>
    %cst_7 = arith.constant 1.000000e+00 : f32
    %14 = vector.broadcast %cst_7 : f32 to vector<1x256xf32>
    %15 = arith.divf %14, %13 : vector<1x256xf32>
    %16 = vector.broadcast %15 : vector<1x256xf32> to vector<3x256xf32>
    %17 = arith.mulf %11, %16 : vector<3x256xf32>
    %18 = tpu.iota {dimensions = array<i32: 0>} : vector<3x256xi32>
    %19 = vector.broadcast %6 : vector<1x256xi32> to vector<3x256xi32>
    %20 = arith.cmpi eq, %18, %19 : vector<3x256xi32>
    %21 = arith.extui %20 : vector<3x256xi1> to vector<3x256xi32>
    %22 = arith.sitofp %21 : vector<3x256xi32> to vector<3x256xf32>
    %23 = math.exp %17 : vector<3x256xf32>
    %cst_8 = arith.constant dense<0.000000e+00> : vector<256xf32>
    %24 = vector.multi_reduction <add>, %23, %cst_8 [0] : vector<3x256xf32> to vector<256xf32>
    %25 = vector.shape_cast %24 : vector<256xf32> to vector<1x256xf32>
    %26 = math.log %25 : vector<1x256xf32>
    %c0_9 = arith.constant 0 : index
    %c0_10 = arith.constant 0 : index
    %27 = vector.load %arg9[%c0_9, %c0_10] : memref<3x256xf32, #tpu.memory_space<vmem>>, vector<3x256xf32>
    %28 = arith.mulf %17, %22 : vector<3x256xf32>
    %29 = arith.addf %27, %28 : vector<3x256xf32>
    %c0_11 = arith.constant 0 : index
    %c0_12 = arith.constant 0 : index
    %30 = vector.load %arg9[%c0_11, %c0_12] : memref<3x256xf32, #tpu.memory_space<vmem>>, vector<3x256xf32>
    tpu.vector_store %arg9[%c0_11, %c0_12], %29 {strides = array<i32>} : memref<3x256xf32, #tpu.memory_space<vmem>>, vector<3x256xf32>,
    %c0_13 = arith.constant 0 : index
    %c0_14 = arith.constant 0 : index
    %31 = vector.load %arg10[%c0_13, %c0_14] : memref<3x256xf32, #tpu.memory_space<vmem>>, vector<3x256xf32>
    %32 = arith.addf %31, %17 : vector<3x256xf32>
    %c0_15 = arith.constant 0 : index
    %c0_16 = arith.constant 0 : index
    %33 = vector.load %arg10[%c0_15, %c0_16] : memref<3x256xf32, #tpu.memory_space<vmem>>, vector<3x256xf32>
    tpu.vector_store %arg10[%c0_15, %c0_16], %32 {strides = array<i32>} : memref<3x256xf32, #tpu.memory_space<vmem>>, vector<3x256xf32>,
    %c0_17 = arith.constant 0 : index
    %c0_18 = arith.constant 0 : index
    %34 = vector.load %arg11[%c0_17, %c0_18] : memref<3x256xf32, #tpu.memory_space<vmem>>, vector<3x256xf32>
    %35 = arith.addf %34, %22 : vector<3x256xf32>
    %c0_19 = arith.constant 0 : index
    %c0_20 = arith.constant 0 : index
    %36 = vector.load %arg11[%c0_19, %c0_20] : memref<3x256xf32, #tpu.memory_space<vmem>>, vector<3x256xf32>
    tpu.vector_store %arg11[%c0_19, %c0_20], %35 {strides = array<i32>} : memref<3x256xf32, #tpu.memory_space<vmem>>, vector<3x256xf32>,
    %c0_21 = arith.constant 0 : index
    %c0_22 = arith.constant 0 : index
    %37 = vector.load %arg12[%c0_21, %c0_22] : memref<3x256xf32, #tpu.memory_space<vmem>>, vector<3x256xf32>
    %38 = vector.broadcast %26 : vector<1x256xf32> to vector<3x256xf32>
    %39 = arith.subf %38, %17 : vector<3x256xf32>
    %40 = arith.mulf %22, %39 : vector<3x256xf32>
    %41 = arith.addf %37, %40 : vector<3x256xf32>
    %c0_23 = arith.constant 0 : index
    %c0_24 = arith.constant 0 : index
    %42 = vector.load %arg12[%c0_23, %c0_24] : memref<3x256xf32, #tpu.memory_space<vmem>>, vector<3x256xf32>
    tpu.vector_store %arg12[%c0_23, %c0_24], %41 {strides = array<i32>} : memref<3x256xf32, #tpu.memory_space<vmem>>, vector<3x256xf32>,
    %c0_i32_25 = arith.constant 0 : i32
    %43 = arith.cmpi eq, %arg2, %c0_i32_25 : i32
    %44 = arith.extui %43 : i1 to i32
    %c0_i32_26 = arith.constant 0 : i32
    %45 = arith.cmpi ne, %44, %c0_i32_26 : i32
    scf.if %45 {
      %c0_27 = arith.constant 0 : index
      %c0_28 = arith.constant 0 : index
      %46 = vector.load %arg9[%c0_27, %c0_28] : memref<3x256xf32, #tpu.memory_space<vmem>>, vector<3x256xf32>
      %cst_29 = arith.constant dense<0.000000e+00> : vector<3xf32>
      %47 = vector.multi_reduction <add>, %46, %cst_29 [1] : vector<3x256xf32> to vector<3xf32>
      %48 = vector.shape_cast %47 : vector<3xf32> to vector<3x1xf32>
      %c0_30 = arith.constant 0 : index
      %c0_31 = arith.constant 0 : index
      %c0_32 = arith.constant 0 : index
      %c0_33 = arith.constant 0 : index
      %49 = vector.load %arg5[%c0_30, %c0_31, %c0_32, %c0_33] : memref<1x1x3x1xf32, #tpu.memory_space<vmem>>, vector<1x1x3x1xf32>
      %50 = vector.shape_cast %49 : vector<1x1x3x1xf32> to vector<3x1xf32>
      %51 = vector.shape_cast %48 : vector<3x1xf32> to vector<1x1x3x1xf32>
      tpu.vector_store %arg5[%c0_30, %c0_31, %c0_32, %c0_33], %51 {strides = array<i32>} : memref<1x1x3x1xf32, #tpu.memory_space<vmem>>, vector<1x1x3x1xf32>,
      %c0_34 = arith.constant 0 : index
      %c0_35 = arith.constant 0 : index
      %52 = vector.load %arg10[%c0_34, %c0_35] : memref<3x256xf32, #tpu.memory_space<vmem>>, vector<3x256xf32>
      %cst_36 = arith.constant dense<0.000000e+00> : vector<3xf32>
      %53 = vector.multi_reduction <add>, %52, %cst_36 [1] : vector<3x256xf32> to vector<3xf32>
      %54 = vector.shape_cast %53 : vector<3xf32> to vector<3x1xf32>
      %c0_37 = arith.constant 0 : index
      %c0_38 = arith.constant 0 : index
      %c0_39 = arith.constant 0 : index
      %c0_40 = arith.constant 0 : index
      %55 = vector.load %arg6[%c0_37, %c0_38, %c0_39, %c0_40] : memref<1x1x3x1xf32, #tpu.memory_space<vmem>>, vector<1x1x3x1xf32>
      %56 = vector.shape_cast %55 : vector<1x1x3x1xf32> to vector<3x1xf32>
      %57 = vector.shape_cast %54 : vector<3x1xf32> to vector<1x1x3x1xf32>
      tpu.vector_store %arg6[%c0_37, %c0_38, %c0_39, %c0_40], %57 {strides = array<i32>} : memref<1x1x3x1xf32, #tpu.memory_space<vmem>>, vector<1x1x3x1xf32>,
      %c0_41 = arith.constant 0 : index
      %c0_42 = arith.constant 0 : index
      %58 = vector.load %arg11[%c0_41, %c0_42] : memref<3x256xf32, #tpu.memory_space<vmem>>, vector<3x256xf32>
      %cst_43 = arith.constant dense<0.000000e+00> : vector<3xf32>
      %59 = vector.multi_reduction <add>, %58, %cst_43 [1] : vector<3x256xf32> to vector<3xf32>
      %60 = vector.shape_cast %59 : vector<3xf32> to vector<3x1xf32>
      %c0_44 = arith.constant 0 : index
      %c0_45 = arith.constant 0 : index
      %c0_46 = arith.constant 0 : index
      %c0_47 = arith.constant 0 : index
      %61 = vector.load %arg7[%c0_44, %c0_45, %c0_46, %c0_47] : memref<1x1x3x1xf32, #tpu.memory_space<vmem>>, vector<1x1x3x1xf32>
      %62 = vector.shape_cast %61 : vector<1x1x3x1xf32> to vector<3x1xf32>
      %63 = vector.shape_cast %60 : vector<3x1xf32> to vector<1x1x3x1xf32>
      tpu.vector_store %arg7[%c0_44, %c0_45, %c0_46, %c0_47], %63 {strides = array<i32>} : memref<1x1x3x1xf32, #tpu.memory_space<vmem>>, vector<1x1x3x1xf32>,
      %c0_48 = arith.constant 0 : index
      %c0_49 = arith.constant 0 : index
      %64 = vector.load %arg12[%c0_48, %c0_49] : memref<3x256xf32, #tpu.memory_space<vmem>>, vector<3x256xf32>
      %cst_50 = arith.constant dense<0.000000e+00> : vector<3xf32>
      %65 = vector.multi_reduction <add>, %64, %cst_50 [1] : vector<3x256xf32> to vector<3xf32>
      %66 = vector.shape_cast %65 : vector<3xf32> to vector<3x1xf32>
      %c0_51 = arith.constant 0 : index
      %c0_52 = arith.constant 0 : index
      %c0_53 = arith.constant 0 : index
      %c0_54 = arith.constant 0 : index
      %67 = vector.load %arg8[%c0_51, %c0_52, %c0_53, %c0_54] : memref<1x1x3x1xf32, #tpu.memory_space<vmem>>, vector<1x1x3x1xf32>
      %68 = vector.shape_cast %67 : vector<1x1x3x1xf32> to vector<3x1xf32>
      %69 = vector.shape_cast %66 : vector<3x1xf32> to vector<1x1x3x1xf32>
      tpu.vector_store %arg8[%c0_51, %c0_52, %c0_53, %c0_54], %69 {strides = array<i32>} : memref<1x1x3x1xf32, #tpu.memory_space<vmem>>, vector<1x1x3x1xf32>,
    } else {
    }
    return
  }
  func.func @transform_0(%arg0: i32, %arg1: i32, %arg2: i32) -> (i32, i32, i32) {
    %c1_i32 = arith.constant 1 : i32
    %0 = arith.muli %arg1, %c1_i32 : i32
    %1 = arith.addi %0, %arg2 : i32
    %c0_i32 = arith.constant 0 : i32
    %c0_i32_0 = arith.constant 0 : i32
    return %arg0, %c0_i32, %1 : i32, i32, i32
  }
  func.func @transform_1(%arg0: i32, %arg1: i32, %arg2: i32) -> (i32, i32, i32) {
    %c1_i32 = arith.constant 1 : i32
    %0 = arith.muli %arg1, %c1_i32 : i32
    %1 = arith.addi %0, %arg2 : i32
    %c0_i32 = arith.constant 0 : i32
    %c0_i32_0 = arith.constant 0 : i32
    return %arg0, %c0_i32, %1 : i32, i32, i32
  }
  func.func @transform_2(%arg0: i32, %arg1: i32, %arg2: i32) -> (i32, i32, i32, i32) {
    %c0_i32 = arith.constant 0 : i32
    %c0_i32_0 = arith.constant 0 : i32
    %c0_i32_1 = arith.constant 0 : i32
    return %arg0, %arg1, %c0_i32, %c0_i32_0 : i32, i32, i32, i32
  }
  func.func @transform_3(%arg0: i32, %arg1: i32, %arg2: i32) -> (i32, i32, i32, i32) {
    %c0_i32 = arith.constant 0 : i32
    %c0_i32_0 = arith.constant 0 : i32
    %c0_i32_1 = arith.constant 0 : i32
    return %arg0, %arg1, %c0_i32, %c0_i32_0 : i32, i32, i32, i32
  }
  func.func @transform_4(%arg0: i32, %arg1: i32, %arg2: i32) -> (i32, i32, i32, i32) {
    %c0_i32 = arith.constant 0 : i32
    %c0_i32_0 = arith.constant 0 : i32
    %c0_i32_1 = arith.constant 0 : i32
    return %arg0, %arg1, %c0_i32, %c0_i32_0 : i32, i32, i32, i32
  }
  func.func @transform_5(%arg0: i32, %arg1: i32, %arg2: i32) -> (i32, i32, i32, i32) {
    %c0_i32 = arith.constant 0 : i32
    %c0_i32_0 = arith.constant 0 : i32
    %c0_i32_1 = arith.constant 0 : i32
    return %arg0, %arg1, %c0_i32, %c0_i32_0 : i32, i32, i32, i32
  }
}

</mosaic_0001>

<llo_original>
// kernel: tpu_custom_call.1
$region0: #{tpu_custom_call.1}
  #allocation0 [shape = 'u32[]', space=smem, size = 0x4, offset = 0x4, fixed_abs, tag = 'smem constant byte address 0x4 - core index']
  #allocation1 [shape = 'u32[144,128]{1,0:T(1,128)}', space=vmem, size = 0x12000, scoped, tag = 'internal scratch']
  #allocation2 [shape = 'f32[3,256]{1,0:T(4,128)}', space=vmem, size = 0x1000, scoped, tag = 'scratch operand']
  #allocation3 [shape = 'f32[3,256]{1,0:T(4,128)}', space=vmem, size = 0x1000, scoped, tag = 'scratch operand']
  #allocation4 [shape = 'f32[3,256]{1,0:T(4,128)}', space=vmem, size = 0x1000, scoped, tag = 'scratch operand']
  #allocation5 [shape = 'f32[3,256]{1,0:T(4,128)}', space=vmem, size = 0x1000, scoped, tag = 'scratch operand']
  %s0 = inlined_call_operand.vmem [shape: f32[2,3,256], index: 0, kind: input, shape index: {}]
  %s1 = inlined_call_operand.vmem [shape: s32[2,1,256], index: 1, kind: input, shape index: {}]
  %s2 = inlined_call_operand.vmem [shape: f32[2,1,3,1], index: 2, kind: output, shape index: {0}]
  %s3 = inlined_call_operand.vmem [shape: f32[2,1,3,1], index: 3, kind: output, shape index: {1}]
  %s4 = inlined_call_operand.vmem [shape: f32[2,1,3,1], index: 4, kind: output, shape index: {2}]
  %s5 = inlined_call_operand.vmem [shape: f32[2,1,3,1], index: 5, kind: output, shape index: {3}]
  %6 = xla_tuple %s2, %s3, %s4, %s5
  %s7 = sld [smem:[#allocation0]]
  $region73: #{tpu_custom_call.1} parent=0
    _
  %s9 = ssub.s32 1, %s7
  %s10 = scalar_select 0, %s9, %s7
  loop: start=0, step=1, limit=4
  $region2: #{tpu_custom_call.1} parent=0 // loop_pre_header
    _
  $region3: #{tpu_custom_call.1} parent=0 // loop_header
    %s12 = sphi 0, %s16
    %p13 = scmp.ge.s32.totalorder %s12, 4
    %s19 = sphi 0, %s38
    %s20 = sphi 0, %s34
    %s21 = sphi 0, %s30
    %s22 = sphi 0, %s19
    %s23 = sphi 0, %s20
    %s24 = sphi 0, %s21
    %s25 = sphi 0, %s22
    %s26 = sphi 0, %s23
    %s27 = sphi 0, %s24
    %s45 = sphi 0, %s47
    %s48 = sphi 0, %s45
    %s49 = sphi 0, %s48
    %s65 = sphi 0, %s49
    %s75 = sphi 0, %s77
    %s78 = sphi 0, %s75
    %s79 = sphi 0, %s78
    %s95 = sphi 0, %s79
    %s103 = sphi 0, %s105
    %s106 = sphi 0, %s103
    %s107 = sphi 0, %s106
    %s123 = sphi 0, %s107
    %s131 = sphi 0, %s133
    %s134 = sphi 0, %s131
    %s135 = sphi 0, %s134
    %s151 = sphi 0, %s135
    %s159 = sphi 0, %s161
    %s162 = sphi 0, %s159
    %s163 = sphi 0, %s162
    %s179 = sphi 0, %s163
    %s187 = sphi 0, %s189
    %s190 = sphi 0, %s187
    %s191 = sphi 0, %s190
    %s207 = sphi 0, %s191
  $region4: #{tpu_custom_call.1} parent=0 // loop_header_branch
    %15 = sbr.rel (%p13) target = $region8
  $region5: #{tpu_custom_call.1} parent=0 // loop_body
    %s17 = ssub.s32 %s12, 1
    %s18 = ssub.s32 %s12, 2
    %s28 = sadd.s32 1, %s21
    %p29 = scmp.ge.s32.totalorder %s28, 1
    %s30 = scalar_select %p29, 0, %s28
    %s31 = sadd.s32 1, %s20
    %s32 = scalar_select %p29, %s31, %s20
    %p33 = scmp.ge.s32.totalorder %s32, 1
    %s34 = scalar_select %p33, 0, %s32
    %s35 = sadd.s32 1, %s19
    %s36 = scalar_select %p33, %s35, %s19
    %p37 = scmp.ge.s32.totalorder %s36, 2
    %s38 = scalar_select %p37, 0, %s36
    %s39 = sadd.s32 %s20, %s21
    %s40 = sadd.s32 %s34, %s30
    %s41 = ssub.s32 %s19, %s38
    %s42 = ssub.s32 %s39, %s40
    %s43 = sor.u32 %s41, %s42
    %p44 = scmp.eq.s32.totalorder %s43, 0
    %s46 = sadd.s32 %s45, 1
    %s47 = scalar_select %p44, %s45, %s46
    %p50 = pneg %p44
    %p51 = scmp.eq.s32.totalorder %s12, 1
    %p52 = por %p50, %p51
    %p53 = scmp.ne.s32.totalorder %s45, %s48
    %p54 = scmp.eq.s32.totalorder %s12, 0
    %p55 = por %p53, %p54
    %p56 = scmp.ne.s32.totalorder %s45, %s48
    %p57 = scmp.eq.s32.totalorder %s17, 1
    %p58 = por %p56, %p57
    %p59 = scmp.ne.s32.totalorder %s48, %s49
    %p60 = scmp.eq.s32.totalorder %s17, 0
    %p61 = por %p59, %p60
    %p62 = scmp.ne.s32.totalorder %s48, %s49
    %p63 = scmp.eq.s32.totalorder %s18, 1
    %p64 = por %p62, %p63
    %p66 = scmp.ne.s32.totalorder %s49, %s65
    %p67 = scmp.eq.s32.totalorder %s18, 0
    %p68 = por %p66, %p67
    %s69 = sadd.s32 %s20, %s21
    %s70 = sadd.s32 %s34, %s30
    %s71 = ssub.s32 %s19, %s38
    %s72 = ssub.s32 %s69, %s70
    %s73 = sor.u32 %s71, %s72
    %p74 = scmp.eq.s32.totalorder %s73, 0
    %s76 = sadd.s32 %s75, 1
    %s77 = scalar_select %p74, %s75, %s76
    %p80 = pneg %p74
    %p81 = scmp.eq.s32.totalorder %s12, 1
    %p82 = por %p80, %p81
    %p83 = scmp.ne.s32.totalorder %s75, %s78
    %p84 = scmp.eq.s32.totalorder %s12, 0
    %p85 = por %p83, %p84
    %p86 = scmp.ne.s32.totalorder %s75, %s78
    %p87 = scmp.eq.s32.totalorder %s17, 1
    %p88 = por %p86, %p87
    %p89 = scmp.ne.s32.totalorder %s78, %s79
    %p90 = scmp.eq.s32.totalorder %s17, 0
    %p91 = por %p89, %p90
    %p92 = scmp.ne.s32.totalorder %s78, %s79
    %p93 = scmp.eq.s32.totalorder %s18, 1
    %p94 = por %p92, %p93
    %p96 = scmp.ne.s32.totalorder %s79, %s95
    %p97 = scmp.eq.s32.totalorder %s18, 0
    %p98 = por %p96, %p97
    %s99 = ssub.s32 %s19, %s38
    %s100 = ssub.s32 %s20, %s34
    %s101 = sor.u32 %s99, %s100
    %p102 = scmp.eq.s32.totalorder %s101, 0
    %s104 = sadd.s32 %s103, 1
    %s105 = scalar_select %p102, %s103, %s104
    %p108 = pneg %p102
    %p109 = scmp.eq.s32.totalorder %s12, 1
    %p110 = por %p108, %p109
    %p111 = scmp.ne.s32.totalorder %s103, %s106
    %p112 = scmp.eq.s32.totalorder %s12, 0
    %p113 = por %p111, %p112
    %p114 = scmp.ne.s32.totalorder %s103, %s106
    %p115 = scmp.eq.s32.totalorder %s17, 1
    %p116 = por %p114, %p115
    %p117 = scmp.ne.s32.totalorder %s106, %s107
    %p118 = scmp.eq.s32.totalorder %s17, 0
    %p119 = por %p117, %p118
    %p120 = scmp.ne.s32.totalorder %s106, %s107
    %p121 = scmp.eq.s32.totalorder %s18, 1
    %p122 = por %p120, %p121
    %p124 = scmp.ne.s32.totalorder %s107, %s123
    %p125 = scmp.eq.s32.totalorder %s18, 0
    %p126 = por %p124, %p125
    %s127 = ssub.s32 %s19, %s38
    %s128 = ssub.s32 %s20, %s34
    %s129 = sor.u32 %s127, %s128
    %p130 = scmp.eq.s32.totalorder %s129, 0
    %s132 = sadd.s32 %s131, 1
    %s133 = scalar_select %p130, %s131, %s132
    %p136 = pneg %p130
    %p137 = scmp.eq.s32.totalorder %s12, 1
    %p138 = por %p136, %p137
    %p139 = scmp.ne.s32.totalorder %s131, %s134
    %p140 = scmp.eq.s32.totalorder %s12, 0
    %p141 = por %p139, %p140
    %p142 = scmp.ne.s32.totalorder %s131, %s134
    %p143 = scmp.eq.s32.totalorder %s17, 1
    %p144 = por %p142, %p143
    %p145 = scmp.ne.s32.totalorder %s134, %s135
    %p146 = scmp.eq.s32.totalorder %s17, 0
    %p147 = por %p145, %p146
    %p148 = scmp.ne.s32.totalorder %s134, %s135
    %p149 = scmp.eq.s32.totalorder %s18, 1
    %p150 = por %p148, %p149
    %p152 = scmp.ne.s32.totalorder %s135, %s151
    %p153 = scmp.eq.s32.totalorder %s18, 0
    %p154 = por %p152, %p153
    %s155 = ssub.s32 %s19, %s38
    %s156 = ssub.s32 %s20, %s34
    %s157 = sor.u32 %s155, %s156
    %p158 = scmp.eq.s32.totalorder %s157, 0
    %s160 = sadd.s32 %s159, 1
    %s161 = scalar_select %p158, %s159, %s160
    %p164 = pneg %p158
    %p165 = scmp.eq.s32.totalorder %s12, 1
    %p166 = por %p164, %p165
    %p167 = scmp.ne.s32.totalorder %s159, %s162
    %p168 = scmp.eq.s32.totalorder %s12, 0
    %p169 = por %p167, %p168
    %p170 = scmp.ne.s32.totalorder %s159, %s162
    %p171 = scmp.eq.s32.totalorder %s17, 1
    %p172 = por %p170, %p171
    %p173 = scmp.ne.s32.totalorder %s162, %s163
    %p174 = scmp.eq.s32.totalorder %s17, 0
    %p175 = por %p173, %p174
    %p176 = scmp.ne.s32.totalorder %s162, %s163
    %p177 = scmp.eq.s32.totalorder %s18, 1
    %p178 = por %p176, %p177
    %p180 = scmp.ne.s32.totalorder %s163, %s179
    %p181 = scmp.eq.s32.totalorder %s18, 0
    %p182 = por %p180, %p181
    %s183 = ssub.s32 %s19, %s38
    %s184 = ssub.s32 %s20, %s34
    %s185 = sor.u32 %s183, %s184
    %p186 = scmp.eq.s32.totalorder %s185, 0
    %s188 = sadd.s32 %s187, 1
    %s189 = scalar_select %p186, %s187, %s188
    %p192 = pneg %p186
    %p193 = scmp.eq.s32.totalorder %s12, 1
    %p194 = por %p192, %p193
    %p195 = scmp.ne.s32.totalorder %s187, %s190
    %p196 = scmp.eq.s32.totalorder %s12, 0
    %p197 = por %p195, %p196
    %p198 = scmp.ne.s32.totalorder %s187, %s190
    %p199 = scmp.eq.s32.totalorder %s17, 1
    %p200 = por %p198, %p199
    %p201 = scmp.ne.s32.totalorder %s190, %s191
    %p202 = scmp.eq.s32.totalorder %s17, 0
    %p203 = por %p201, %p202
    %p204 = scmp.ne.s32.totalorder %s190, %s191
    %p205 = scmp.eq.s32.totalorder %s18, 1
    %p206 = por %p204, %p205
    %p208 = scmp.ne.s32.totalorder %s191, %s207
    %p209 = scmp.eq.s32.totalorder %s18, 0
    %p210 = por %p208, %p209
    %p211 = scmp.le.s32.totalorder 1, %s12
    %p212 = scmp.lt.s32.totalorder %s12, 3
    %p213 = pnand %p211, %p212
    %p214 = pneg %p213
    // Predicated region
    $region9: #{tpu_custom_call.1} parent=5 // pred_check
      _
    $region10: #{tpu_custom_call.1} parent=5 // pred_check_branch
      %216 = sbr.rel (%p213) target = $region12
    $region11: #{tpu_custom_call.1} parent=5 // pred_region
      %s217 = ssub.s32 %s12, 1
    $region12: #{tpu_custom_call.1} parent=5 // pred_fallthru
      _
    %p218 = scmp.lt.s32.totalorder %s12, 2
    // Predicated region
    $region13: #{tpu_custom_call.1} parent=5 // pred_check
      %p219 = pneg %p218
    $region14: #{tpu_custom_call.1} parent=5 // pred_check_branch
      %221 = sbr.rel (%p219) target = $region16
    $region15: #{tpu_custom_call.1} parent=5 // pred_region
      // Predicated region
      $region17: #{tpu_custom_call.1} parent=15 // pred_check
        %p222 = pneg %p55
      $region18: #{tpu_custom_call.1} parent=15 // pred_check_branch
        %224 = sbr.rel (%p222) target = $region20
      $region19: #{tpu_custom_call.1} parent=15 // pred_region
        %s225 = sadd.s32 %s20, %s21
        %s226 = smul.u32 2, %s225
        %p227 = scmp.lt.s32.totalorder %s19, 1
        %s228 = scalar_select %p227, %s19, 1
        %p229 = scmp.lt.s32.totalorder %s226, 1
        %s230 = scalar_select %p229, %s226, 1
        %s231 = smul.addr %s228, 2
        %s232 = sadd.s32 %s230, %s231
        %s233 = smul.addr %s232, 4
        %s234 = scalar_lea.vmem %s0, %s233
        %s235 = sadd.s32 %s20, %s21
        %s236 = smul.u32 2, %s235
      $region20: #{tpu_custom_call.1} parent=15 // pred_fallthru
        _
      // Predicated region
      $region21: #{tpu_custom_call.1} parent=15 // pred_check
        %p237 = pneg %p85
      $region22: #{tpu_custom_call.1} parent=15 // pred_check_branch
        %239 = sbr.rel (%p237) target = $region24
      $region23: #{tpu_custom_call.1} parent=15 // pred_region
        %s240 = sadd.s32 %s20, %s21
        %s241 = smul.u32 2, %s240
        %p242 = scmp.lt.s32.totalorder %s19, 1
        %s243 = scalar_select %p242, %s19, 1
        %p244 = scmp.lt.s32.totalorder %s241, 1
        %s245 = scalar_select %p244, %s241, 1
        %s246 = smul.addr %s243, 2
        %s247 = sadd.s32 %s245, %s246
        %s248 = scalar_lea.vmem %s1, %s247
        %s249 = sadd.s32 %s20, %s21
        %s250 = smul.u32 2, %s249
      $region24: #{tpu_custom_call.1} parent=15 // pred_fallthru
        _
    $region16: #{tpu_custom_call.1} parent=5 // pred_fallthru
      _
    %p251 = scmp.le.s32.totalorder 1, %s12
    %p252 = scmp.lt.s32.totalorder %s12, 3
    %p253 = pnand %p251, %p252
    %p254 = pneg %p253
    // Predicated region
    $region25: #{tpu_custom_call.1} parent=5 // pred_check
      _
    $region26: #{tpu_custom_call.1} parent=5 // pred_check_branch
      %256 = sbr.rel (%p253) target = $region28
    $region27: #{tpu_custom_call.1} parent=5 // pred_region
      %s257 = ssub.s32 %s12, 1
      %s258 = sadd.s32 %s23, %s24
      %s259 = smul.u32 2, %s258
      %p260 = scmp.lt.s32.totalorder %s22, 1
      %s261 = scalar_select %p260, %s22, 1
      %p262 = scmp.lt.s32.totalorder %s259, 1
      %s263 = scalar_select %p262, %s259, 1
      %s264 = smul.addr %s261, 2
      %s265 = sadd.s32 %s263, %s264
      %s266 = smul.addr %s265, 4
      %s267 = scalar_lea.vmem %s0, %s266
      %p268 = pneg %p61
      %p269 = pneg %p58
      %s270 = sadd.s32 %s23, %s24
      %s271 = smul.u32 2, %s270
      %p272 = scmp.lt.s32.totalorder %s22, 1
      %s273 = scalar_select %p272, %s22, 1
      %p274 = scmp.lt.s32.totalorder %s271, 1
      %s275 = scalar_select %p274, %s271, 1
      %s276 = smul.addr %s273, 2
      %s277 = sadd.s32 %s275, %s276
      %s278 = scalar_lea.vmem %s1, %s277
      %p279 = pneg %p91
      %p280 = pneg %p88
      %p281 = pneg %p119
      %p282 = pneg %p116
      %p283 = scmp.lt.s32.totalorder %s22, 1
      %s284 = scalar_select %p283, %s22, 1
      %p285 = scmp.lt.s32.totalorder %s23, 0
      %s286 = scalar_select %p285, %s23, 0
      %s287 = sadd.s32 %s286, %s284
      %s288 = smul.addr %s287, 4
      %s289 = scalar_lea.vmem %s2, %s288
      %p290 = pneg %p147
      %p291 = pneg %p144
      %p292 = scmp.lt.s32.totalorder %s22, 1
      %s293 = scalar_select %p292, %s22, 1
      %p294 = scmp.lt.s32.totalorder %s23, 0
      %s295 = scalar_select %p294, %s23, 0
      %s296 = sadd.s32 %s295, %s293
      %s297 = smul.addr %s296, 4
      %s298 = scalar_lea.vmem %s3, %s297
      %p299 = pneg %p175
      %p300 = pneg %p172
      %p301 = scmp.lt.s32.totalorder %s22, 1
      %s302 = scalar_select %p301, %s22, 1
      %p303 = scmp.lt.s32.totalorder %s23, 0
      %s304 = scalar_select %p303, %s23, 0
      %s305 = sadd.s32 %s304, %s302
      %s306 = smul.addr %s305, 4
      %s307 = scalar_lea.vmem %s4, %s306
      %p308 = pneg %p203
      %p309 = pneg %p200
      %p310 = scmp.lt.s32.totalorder %s22, 1
      %s311 = scalar_select %p310, %s22, 1
      %p312 = scmp.lt.s32.totalorder %s23, 0
      %s313 = scalar_select %p312, %s23, 0
      %s314 = sadd.s32 %s313, %s311
      %s315 = smul.addr %s314, 4
      %s316 = scalar_lea.vmem %s5, %s315
      %s317 = sadd.s32 %s23, %s24
      %s318 = smul.u32 2, %s317
      %p319 = scmp.lt.s32.totalorder %s22, 1
      %s320 = scalar_select %p319, %s22, 1
      %p321 = scmp.lt.s32.totalorder %s318, 1
      %s322 = scalar_select %p321, %s318, 1
      %s323 = smul.addr %s320, 2
      %s324 = sadd.s32 %s322, %s323
      %s325 = smul.addr %s324, 4
      %s326 = scalar_lea.vmem %s0, %s325
      %s327 = sadd.s32 %s23, %s24
      %s328 = smul.u32 2, %s327
      %s329 = sadd.s32 %s23, %s24
      %s330 = smul.u32 2, %s329
      %p331 = scmp.lt.s32.totalorder %s22, 1
      %s332 = scalar_select %p331, %s22, 1
      %p333 = scmp.lt.s32.totalorder %s330, 1
      %s334 = scalar_select %p333, %s330, 1
      %s335 = smul.addr %s332, 2
      %s336 = sadd.s32 %s334, %s335
      %s337 = scalar_lea.vmem %s1, %s336
      %s338 = sadd.s32 %s23, %s24
      %s339 = smul.u32 2, %s338
      %p340 = scmp.lt.s32.totalorder %s22, 1
      %s341 = scalar_select %p340, %s22, 1
      %p342 = scmp.lt.s32.totalorder %s23, 0
      %s343 = scalar_select %p342, %s23, 0
      %s344 = sadd.s32 %s343, %s341
      %s345 = smul.addr %s344, 4
      %s346 = scalar_lea.vmem %s2, %s345
      %p347 = scmp.lt.s32.totalorder %s22, 1
      %s348 = scalar_select %p347, %s22, 1
      %p349 = scmp.lt.s32.totalorder %s23, 0
      %s350 = scalar_select %p349, %s23, 0
      %s351 = sadd.s32 %s350, %s348
      %s352 = smul.addr %s351, 4
      %s353 = scalar_lea.vmem %s3, %s352
      %p354 = scmp.lt.s32.totalorder %s22, 1
      %s355 = scalar_select %p354, %s22, 1
      %p356 = scmp.lt.s32.totalorder %s23, 0
      %s357 = scalar_select %p356, %s23, 0
      %s358 = sadd.s32 %s357, %s355
      %s359 = smul.addr %s358, 4
      %s360 = scalar_lea.vmem %s4, %s359
      %p361 = scmp.lt.s32.totalorder %s22, 1
      %s362 = scalar_select %p361, %s22, 1
      %p363 = scmp.lt.s32.totalorder %s23, 0
      %s364 = scalar_select %p363, %s23, 0
      %s365 = sadd.s32 %s364, %s362
      %s366 = smul.addr %s365, 4
      %s367 = scalar_lea.vmem %s5, %s366
      %p368 = scmp.eq.s32.totalorder %s24, 0
      // Predicated region
      $region29: #{tpu_custom_call.1} parent=27 // pred_check
        %p369 = pneg %p368
      $region30: #{tpu_custom_call.1} parent=27 // pred_check_branch
        %371 = sbr.rel (%p369) target = $region32
      $region31: #{tpu_custom_call.1} parent=27 // pred_region
        %372 = vst [vmem:[#allocation2] sm:$0x77] 0.0
        %373 = vst [vmem:[#allocation3] sm:$0x77] 0.0
        %374 = vst [vmem:[#allocation4] sm:$0x77] 0.0
        %375 = vst [vmem:[#allocation5] sm:$0x77] 0.0
      $region32: #{tpu_custom_call.1} parent=27 // pred_fallthru
        _
      %v376 = vld [vmem:[%s326] sm:$0x77]
      %v377 = vld [vmem:[%s337] sm:$0x3]
      %v379 = vcombine.high %v376, %v376
      %vm381 = vcmask 1042432
      %v382 = vsel %vm381, %v376, -inf
      %v383 = vrot.slane %v382, 4
      %v384 = vmax.f32 %v382, %v383
      %v385 = vrot.slane %v384, 2
      %v386 = vmax.f32 %v384, %v385
      %v387 = vrot.slane %v386, 1
      %v388 = vmax.f32 %v386, %v387
      %v389 = vsel %vm381, %v379, -inf
      %v390 = vrot.slane %v389, 4
      %v391 = vmax.f32 %v389, %v390
      %v392 = vrot.slane %v391, 2
      %v393 = vmax.f32 %v391, %v392
      %v394 = vrot.slane %v393, 1
      %v395 = vmax.f32 %v393, %v394
      %v398 = vcombine.low %v388, %v395
      %v400 = vsub.f32 %v376, %v398
      %v401 = vmul.f32 %v400, 1.442695
      %v402 = vpow.pop %v401
      %v404 = vcombine.high %v402, %v402
      %v406 = vsel %vm381, %v402, 0.0
      %v407 = vrot.slane %v406, 4
      %v408 = vadd.f32 %v406, %v407
      %v409 = vrot.slane %v408, 2
      %v410 = vadd.f32 %v408, %v409
      %v411 = vrot.slane %v410, 1
      %v412 = vadd.f32 %v410, %v411
      %v413 = vsel %vm381, %v404, 0.0
      %v414 = vrot.slane %v413, 4
      %v415 = vadd.f32 %v413, %v414
      %v416 = vrot.slane %v415, 2
      %v417 = vadd.f32 %v415, %v416
      %v418 = vrot.slane %v417, 1
      %v419 = vadd.f32 %v417, %v418
      %v420 = vrcp.pop %v412
      %v421 = vmul.f32 1.0, %v420
      %v422 = vrcp.pop %v419
      %v423 = vmul.f32 1.0, %v422
      %v426 = vcombine.low %v421, %v423
      %v428 = vmul.f32 %v402, %v426
      %v429 = vlaneseq
      %v430 = vshrl.u32 %v429, 7
      %v431 = vlaneseq
      %v432 = vshrl.u32 %v431, 7
      %v433 = vsub.s32 0, %v432
      %v434 = vrot.slane %v377, %v433
      %v435 = vlaneseq
      %v436 = vshrl.u32 %v435, 7
      %v437 = vsub.s32 1, %v436
      %v438 = vrot.slane %v377, %v437
      %vm439 = vcmp.eq.s32.totalorder %v430, %v434
      %vm440 = vcmp.eq.s32.totalorder %v430, %v438
      %v441 = vsel %vm439, 1, 0
      %v442 = vsel %vm440, 1, 0
      %v443 = vcvt.s32.f32 %v441
      %v444 = vcvt.s32.f32 %v442
      %v445 = vmul.f32 %v428, 1.442695
      %v446 = vpow.pop %v445
      %v448 = vcombine.high %v446, %v446
      %v450 = vsel %vm381, %v446, 0.0
      %v451 = vrot.slane %v450, 4
      %v452 = vadd.f32 %v450, %v451
      %v453 = vrot.slane %v452, 2
      %v454 = vadd.f32 %v452, %v453
      %v455 = vrot.slane %v454, 1
      %v456 = vadd.f32 %v454, %v455
      %v457 = vsel %vm381, %v448, 0.0
      %v458 = vrot.slane %v457, 4
      %v459 = vadd.f32 %v457, %v458
      %v460 = vrot.slane %v459, 2
      %v461 = vadd.f32 %v459, %v460
      %v462 = vrot.slane %v461, 1
      %v463 = vadd.f32 %v461, %v462
      %v464 = vlog2.pop %v456
      %v465 = vmul.f32 %v464, 0.6931472
      %v466 = vlog2.pop %v463
      %v467 = vmul.f32 %v466, 0.6931472
      %v468 = vld [vmem:[#allocation2] sm:$0x77]
      %v471 = vcombine.low %v443, %v444
      %v473 = vmul.f32 %v428, %v471
      %v474 = vadd.f32 %v468, %v473
      %475 = vst [vmem:[#allocation2] sm:$0x77] %v474
      %v476 = vld [vmem:[#allocation3] sm:$0x77]
      %v477 = vadd.f32 %v476, %v428
      %478 = vst [vmem:[#allocation3] sm:$0x77] %v477
      %v479 = vld [vmem:[#allocation4] sm:$0x77]
      %v480 = vadd.f32 %v479, %v471
      %481 = vst [vmem:[#allocation4] sm:$0x77] %v480
      %v482 = vld [vmem:[#allocation5] sm:$0x77]
      %v484 = vcombine.high %v428, %v428
      %v486 = vsub.f32 %v465, %v428
      %v487 = vsub.f32 %v467, %v484
      %v488 = vmul.f32 %v443, %v486
      %v489 = vmul.f32 %v444, %v487
      %v492 = vcombine.low %v488, %v489
      %v494 = vadd.f32 %v482, %v492
      %495 = vst [vmem:[#allocation5] sm:$0x77] %v494
      // Predicated region
      $region33: #{tpu_custom_call.1} parent=27 // pred_check
        %p496 = pneg %p368
      $region34: #{tpu_custom_call.1} parent=27 // pred_check_branch
        %498 = sbr.rel (%p496) target = $region36
      $region35: #{tpu_custom_call.1} parent=27 // pred_region
        %v499 = vld [vmem:[#allocation2] sm:$0x77]
        %v501 = vcombine.high %v499, %v499
        %v503 = vsel %vm381, %v499, 0.0
        %v504 = vsel %vm381, %v501, 0.0
        %v505 = vadd.f32 %v503, %v504
        %506 = vadd.xlane.f32.xlu0 %v505
        %v507 = vpop.xlane.xlu0 %506
        %vm508 = vcmask 2048
        %509 = vst.msk [vmem:[%s346] sm:$0x7] %vm508, %v507
        %v510 = vld [vmem:[#allocation3] sm:$0x77]
        %v512 = vcombine.high %v510, %v510
        %v514 = vsel %vm381, %v510, 0.0
        %v515 = vsel %vm381, %v512, 0.0
        %v516 = vadd.f32 %v514, %v515
        %517 = vadd.xlane.f32.xlu0 %v516
        %v518 = vpop.xlane.xlu0 %517
        %519 = vst.msk [vmem:[%s353] sm:$0x7] %vm508, %v518
        %v520 = vld [vmem:[#allocation4] sm:$0x77]
        %v522 = vcombine.high %v520, %v520
        %v524 = vsel %vm381, %v520, 0.0
        %v525 = vsel %vm381, %v522, 0.0
        %v526 = vadd.f32 %v524, %v525
        %527 = vadd.xlane.f32.xlu0 %v526
        %v528 = vpop.xlane.xlu0 %527
        %529 = vst.msk [vmem:[%s360] sm:$0x7] %vm508, %v528
        %v530 = vld [vmem:[#allocation5] sm:$0x77]
        %v532 = vcombine.high %v530, %v530
        %v534 = vsel %vm381, %v530, 0.0
        %v535 = vsel %vm381, %v532, 0.0
        %v536 = vadd.f32 %v534, %v535
        %537 = vadd.xlane.f32.xlu0 %v536
        %v538 = vpop.xlane.xlu0 %537
        %539 = vst.msk [vmem:[%s367] sm:$0x7] %vm508, %v538
      $region36: #{tpu_custom_call.1} parent=27 // pred_fallthru
        _
      %p540 = scmp.lt.s32.totalorder %s22, 1
      %s541 = scalar_select %p540, %s22, 1
      %p542 = scmp.lt.s32.totalorder %s23, 0
      %s543 = scalar_select %p542, %s23, 0
      %s544 = sadd.s32 %s543, %s541
      %s545 = smul.addr %s544, 4
      %s546 = scalar_lea.vmem %s2, %s545
      %p547 = scmp.lt.s32.totalorder %s22, 1
      %s548 = scalar_select %p547, %s22, 1
      %p549 = scmp.lt.s32.totalorder %s23, 0
      %s550 = scalar_select %p549, %s23, 0
      %s551 = sadd.s32 %s550, %s548
      %s552 = smul.addr %s551, 4
      %s553 = scalar_lea.vmem %s3, %s552
      %p554 = scmp.lt.s32.totalorder %s22, 1
      %s555 = scalar_select %p554, %s22, 1
      %p556 = scmp.lt.s32.totalorder %s23, 0
      %s557 = scalar_select %p556, %s23, 0
      %s558 = sadd.s32 %s557, %s555
      %s559 = smul.addr %s558, 4
      %s560 = scalar_lea.vmem %s4, %s559
      %p561 = scmp.lt.s32.totalorder %s22, 1
      %s562 = scalar_select %p561, %s22, 1
      %p563 = scmp.lt.s32.totalorder %s23, 0
      %s564 = scalar_select %p563, %s23, 0
      %s565 = sadd.s32 %s564, %s562
      %s566 = smul.addr %s565, 4
      %s567 = scalar_lea.vmem %s5, %s566
      // Predicated region
      $region37: #{tpu_custom_call.1} parent=27 // pred_check
        %p568 = pneg %p116
      $region38: #{tpu_custom_call.1} parent=27 // pred_check_branch
        %570 = sbr.rel (%p568) target = $region40
      $region39: #{tpu_custom_call.1} parent=27 // pred_region
        _
      $region40: #{tpu_custom_call.1} parent=27 // pred_fallthru
        _
      // Predicated region
      $region41: #{tpu_custom_call.1} parent=27 // pred_check
        %p571 = pneg %p144
      $region42: #{tpu_custom_call.1} parent=27 // pred_check_branch
        %573 = sbr.rel (%p571) target = $region44
      $region43: #{tpu_custom_call.1} parent=27 // pred_region
        _
      $region44: #{tpu_custom_call.1} parent=27 // pred_fallthru
        _
      // Predicated region
      $region45: #{tpu_custom_call.1} parent=27 // pred_check
        %p574 = pneg %p172
      $region46: #{tpu_custom_call.1} parent=27 // pred_check_branch
        %576 = sbr.rel (%p574) target = $region48
      $region47: #{tpu_custom_call.1} parent=27 // pred_region
        _
      $region48: #{tpu_custom_call.1} parent=27 // pred_fallthru
        _
      // Predicated region
      $region49: #{tpu_custom_call.1} parent=27 // pred_check
        %p577 = pneg %p200
      $region50: #{tpu_custom_call.1} parent=27 // pred_check_branch
        %579 = sbr.rel (%p577) target = $region52
      $region51: #{tpu_custom_call.1} parent=27 // pred_region
        _
      $region52: #{tpu_custom_call.1} parent=27 // pred_fallthru
        _
    $region28: #{tpu_custom_call.1} parent=5 // pred_fallthru
      _
    %p580 = scmp.le.s32.totalorder 2, %s12
    // Predicated region
    $region53: #{tpu_custom_call.1} parent=5 // pred_check
      %p581 = pneg %p580
    $region54: #{tpu_custom_call.1} parent=5 // pred_check_branch
      %583 = sbr.rel (%p581) target = $region56
    $region55: #{tpu_custom_call.1} parent=5 // pred_region
      %s584 = ssub.s32 %s12, 2
      // Predicated region
      $region57: #{tpu_custom_call.1} parent=55 // pred_check
        %p585 = pneg %p122
      $region58: #{tpu_custom_call.1} parent=55 // pred_check_branch
        %587 = sbr.rel (%p585) target = $region60
      $region59: #{tpu_custom_call.1} parent=55 // pred_region
        %p588 = scmp.lt.s32.totalorder %s25, 1
        %s589 = scalar_select %p588, %s25, 1
        %p590 = scmp.lt.s32.totalorder %s26, 0
        %s591 = scalar_select %p590, %s26, 0
        %s592 = sadd.s32 %s591, %s589
        %s593 = smul.addr %s592, 4
        %s594 = scalar_lea.vmem %s2, %s593
      $region60: #{tpu_custom_call.1} parent=55 // pred_fallthru
        _
      // Predicated region
      $region61: #{tpu_custom_call.1} parent=55 // pred_check
        %p595 = pneg %p150
      $region62: #{tpu_custom_call.1} parent=55 // pred_check_branch
        %597 = sbr.rel (%p595) target = $region64
      $region63: #{tpu_custom_call.1} parent=55 // pred_region
        %p598 = scmp.lt.s32.totalorder %s25, 1
        %s599 = scalar_select %p598, %s25, 1
        %p600 = scmp.lt.s32.totalorder %s26, 0
        %s601 = scalar_select %p600, %s26, 0
        %s602 = sadd.s32 %s601, %s599
        %s603 = smul.addr %s602, 4
        %s604 = scalar_lea.vmem %s3, %s603
      $region64: #{tpu_custom_call.1} parent=55 // pred_fallthru
        _
      // Predicated region
      $region65: #{tpu_custom_call.1} parent=55 // pred_check
        %p605 = pneg %p178
      $region66: #{tpu_custom_call.1} parent=55 // pred_check_branch
        %607 = sbr.rel (%p605) target = $region68
      $region67: #{tpu_custom_call.1} parent=55 // pred_region
        %p608 = scmp.lt.s32.totalorder %s25, 1
        %s609 = scalar_select %p608, %s25, 1
        %p610 = scmp.lt.s32.totalorder %s26, 0
        %s611 = scalar_select %p610, %s26, 0
        %s612 = sadd.s32 %s611, %s609
        %s613 = smul.addr %s612, 4
        %s614 = scalar_lea.vmem %s4, %s613
      $region68: #{tpu_custom_call.1} parent=55 // pred_fallthru
        _
      // Predicated region
      $region69: #{tpu_custom_call.1} parent=55 // pred_check
        %p615 = pneg %p206
      $region70: #{tpu_custom_call.1} parent=55 // pred_check_branch
        %617 = sbr.rel (%p615) target = $region72
      $region71: #{tpu_custom_call.1} parent=55 // pred_region
        %p618 = scmp.lt.s32.totalorder %s25, 1
        %s619 = scalar_select %p618, %s25, 1
        %p620 = scmp.lt.s32.totalorder %s26, 0
        %s621 = scalar_select %p620, %s26, 0
        %s622 = sadd.s32 %s621, %s619
        %s623 = smul.addr %s622, 4
        %s624 = scalar_lea.vmem %s5, %s623
      $region72: #{tpu_custom_call.1} parent=55 // pred_fallthru
        _
    $region56: #{tpu_custom_call.1} parent=5 // pred_fallthru
      _
  $region6: #{tpu_custom_call.1} parent=0 // loop_footer
    %s16 = sadd.s32 1, %s12
  $region7: #{tpu_custom_call.1} parent=0 // loop_footer_branch
    %11 = sbr.rel target = $region3
  $region8: #{tpu_custom_call.1} parent=0 // loop_exit
    _

</llo_original>
